<compile_context>
chip_gen: v6e
topology: v6e:2x2x1
jax: 0.10.0
libtpu: 0.0.40
codegen_flags: <defaults>
</compile_context>

<pallas_src>
import functools

import jax
import jax.numpy as jnp
from jax.experimental import pallas as pl
from jax.experimental.pallas import tpu as pltpu


def _round_up(n: int, m: int) -> int:
    return ((n + m - 1) // m) * m


def _cdiv(a: int, b: int) -> int:
    return (a + b - 1) // b


def _supports_bf16_vpu() -> bool:
    """bf16 VPU/EUP exists on v6e/v7x; v5e (and older) must use the f32 path."""
    try:
        kind = jax.devices()[0].device_kind.lower()
    except Exception:
        return False
    return any(tag in kind for tag in ("v6", "v7", "7x"))


def flownet_kernel(h_ref, x_ref, beta_ref,
                   w1h_ref, w1x_ref, w1b_ref, b1_ref, w2_ref, b2_ref,
                   out_ref, *, act_dtype):
    mxu = jnp.bfloat16
    # First layer: two small MXU dots (f32 accumulation) + beta broadcast term.
    z = jnp.dot(h_ref[...].astype(mxu), w1h_ref[...],
                preferred_element_type=jnp.float32)
    z = z + jnp.dot(x_ref[...].astype(mxu), w1x_ref[...],
                    preferred_element_type=jnp.float32)
    z = z + beta_ref[...] * w1b_ref[...]          # (tb,1)*(1,hidden) VPU broadcast, f32
    z = z + b1_ref[...]
    # SiLU: bf16 on v6e/v7x (2 elems/lane on VPU/EUP), f32 on v5e.
    z = z.astype(act_dtype)
    a = z * jax.nn.sigmoid(z)
    # Second layer.
    d = jnp.dot(a.astype(mxu), w2_ref[...], preferred_element_type=jnp.float32)
    out_ref[...] = (d + b2_ref[...]).astype(out_ref.dtype)


def flownet_forward(h_t, x_t, beta, params, *, tile_b=1024):
    """FlowNet.forward(h_t, x_t, beta) -> D_theta, shape [B, D] like x_t."""
    B, D = x_t.shape
    H = h_t.shape[1]
    hidden = params["w1h"].shape[1]

    # Tolerate beta of shape (B,) or (B, 1).
    beta = jnp.reshape(beta, (B, 1)).astype(x_t.dtype)

    # Adaptive batch tile: bounds dead-row padding to a few percent.
    n_tiles = max(1, _cdiv(B, tile_b))
    tb = min(_round_up(_cdiv(B, n_tiles), 16), _round_up(B, 16))
    Bp = _round_up(B, tb)

    # Only the batch dim is (possibly) padded; feature dims stay at their true
    # sizes, so there is no concat / K-pad / dtype round-trip through HBM.
    def pad_b(a):
        return a if Bp == B else jnp.pad(a, ((0, Bp - B), (0, 0)))

    h_p, x_p, b_p = pad_b(h_t), pad_b(x_t), pad_b(beta)

    # Weights: MXU operands stored bf16 (tiny, one-time cast); bias-like terms f32.
    w1h = params["w1h"].astype(jnp.bfloat16)
    w1x = params["w1x"].astype(jnp.bfloat16)
    w1b = params["w1b"].astype(jnp.float32)
    b1 = params["b1"].astype(jnp.float32)
    w2 = params["w2"].astype(jnp.bfloat16)
    b2 = params["b2"].astype(jnp.float32)

    act_dtype = jnp.bfloat16 if _supports_bf16_vpu() else jnp.float32
    kern = functools.partial(flownet_kernel, act_dtype=act_dtype)

    cost = pl.CostEstimate(
        flops=2 * Bp * hidden * (H + D + 1) + 2 * Bp * hidden * D,
        transcendentals=Bp * hidden,
        bytes_accessed=(4 * Bp * (H + D + 1)            # f32 activations in
                        + 4 * Bp * D                    # f32 output
                        + 2 * hidden * (H + D) + 2 * hidden * D   # bf16 weights
                        + 4 * (2 * hidden + D + D)),    # f32 biases / w1b
    )

    def build(single_buffer_weights: bool):
        def wspec(shape):
            # Grid-constant operands: index_map never changes, so a single VMEM
            # buffer suffices (halves weight VMEM on v7x's 64 MiB).
            if single_buffer_weights:
                return pl.BlockSpec(shape, lambda i: (0, 0),
                                    pipeline_mode=pl.Buffered(1))
            return pl.BlockSpec(shape, lambda i: (0, 0))

        return pl.pallas_call(
            kern,
            out_shape=jax.ShapeDtypeStruct((Bp, D), jnp.float32),
            grid=(Bp // tb,),
            in_specs=[
                pl.BlockSpec((tb, H), lambda i: (i, 0)),   # h_t  (batch-tiled, f32)
                pl.BlockSpec((tb, D), lambda i: (i, 0)),   # x_t
                pl.BlockSpec((tb, 1), lambda i: (i, 0)),   # beta
                wspec((H, hidden)),                        # W1h  (VMEM-resident)
                wspec((D, hidden)),                        # W1x
                wspec((1, hidden)),                        # w1b
                wspec((1, hidden)),                        # b1
                wspec((hidden, D)),                        # W2
                wspec((1, D)),                             # b2
            ],
            out_specs=pl.BlockSpec((tb, D), lambda i: (i, 0)),
            compiler_params=pltpu.CompilerParams(
                dimension_semantics=("parallel",),         # batch tiles over TCs
                vmem_limit_bytes=32 * 1024 * 1024,         # safe on v5e/v6e/v7x
            ),
            cost_estimate=cost,
        )

    args = (h_p, x_p, b_p, w1h, w1x, w1b, b1, w2, b2)
    try:
        out = build(True)(*args)
    except Exception:
        # Older Pallas without pipeline_mode support: fall back to default
        # double-buffered grid-constant operands (correctness identical).
        out = build(False)(*args)

    out = out if Bp == B else out[:B]
    return out.astype(x_t.dtype)


def flownet_denoiser(h_t, x_t, beta, params, return_score=False):
    # Same forward pass as FlowNet.denoiser (return_score path is identical here).
    return flownet_forward(h_t, x_t, beta, params)


def flownet_reference(h_t, x_t, beta, params):
    """Pure-JAX reference with the same bf16 MXU-operand casting as the kernel."""
    bf = jnp.bfloat16
    beta = jnp.reshape(beta, (h_t.shape[0], 1)).astype(jnp.float32)
    z = (jnp.dot(h_t.astype(bf), params["w1h"].astype(bf),
                 preferred_element_type=jnp.float32)
         + jnp.dot(x_t.astype(bf), params["w1x"].astype(bf),
                   preferred_element_type=jnp.float32)
         + beta * params["w1b"] + params["b1"])
    a = z * jax.nn.sigmoid(z)
    d = jnp.dot(a.astype(bf), params["w2"].astype(bf),
                preferred_element_type=jnp.float32) + params["b2"]
    return d.astype(x_t.dtype)


def init_params(key, h_dim, x_dim, hidden):
    k1, k2, k3, k4 = jax.random.split(key, 4)
    scale1 = 1.0 / jnp.sqrt(h_dim + x_dim + 1)
    scale2 = 1.0 / jnp.sqrt(hidden)
    return {
        "w1h": jax.random.normal(k1, (h_dim, hidden), jnp.float32) * scale1,
        "w1x": jax.random.normal(k2, (x_dim, hidden), jnp.float32) * scale1,
        "w1b": jax.random.normal(k3, (1, hidden), jnp.float32) * scale1,
        "b1":  jnp.zeros((1, hidden), jnp.float32),
        "w2":  jax.random.normal(k4, (hidden, x_dim), jnp.float32) * scale2,
        "b2":  jnp.zeros((1, x_dim), jnp.float32),
    }


if __name__ == "__main__":
    B, H, D, HIDDEN = 2, 32, 4, 64

    key = jax.random.PRNGKey(0)
    kh, kx, kb, kp = jax.random.split(key, 4)

    h_t = jax.random.normal(kh, (B, H), jnp.float32)     # latent / hidden state
    x_t = jax.random.normal(kx, (B, D), jnp.float32)     # noised sample
    beta = jax.random.uniform(kb, (B, 1), jnp.float32)   # noise level per batch

    params = init_params(kp, H, D, HIDDEN)

    out = flownet_forward(h_t, x_t, beta, params)
    out = jax.block_until_ready(out)

    ref = flownet_reference(h_t, x_t, beta, params)
    assert out.shape == x_t.shape
    assert jnp.allclose(out, ref, atol=2e-2, rtol=2e-2), "mismatch vs reference"

    print("KERNEL_OK")
</pallas_src>

<mosaic_0001>
module attributes {stable_mosaic.version = 11 : i64} {
  func.func @flownet_kernel(%arg0: i32, %arg1: memref<16x32xf32, #tpu.memory_space<vmem>>, %arg2: memref<16x4xf32, #tpu.memory_space<vmem>>, %arg3: memref<16x1xf32, #tpu.memory_space<vmem>>, %arg4: memref<32x64xbf16, #tpu.memory_space<vmem>>, %arg5: memref<4x64xbf16, #tpu.memory_space<vmem>>, %arg6: memref<1x64xf32, #tpu.memory_space<vmem>>, %arg7: memref<1x64xf32, #tpu.memory_space<vmem>>, %arg8: memref<64x4xbf16, #tpu.memory_space<vmem>>, %arg9: memref<1x4xf32, #tpu.memory_space<vmem>>, %arg10: memref<16x4xf32, #tpu.memory_space<vmem>>) attributes {dimension_semantics = [#tpu.dimension_semantics<parallel>], iteration_bounds = array<i64: 1>, scalar_prefetch = 0 : i64, scratch_operands = 0 : i64, tpu.core_type = #tpu.core_type<tc>, window_params = [{transform_indices = @transform_0, window_bounds = array<i64: 16, 32>}, {transform_indices = @transform_1, window_bounds = array<i64: 16, 4>}, {transform_indices = @transform_2, window_bounds = array<i64: 16, 1>}, {pipeline_mode = #tpu.pipeline_mode<synchronous>, transform_indices = @transform_3, window_bounds = array<i64: 32, 64>}, {pipeline_mode = #tpu.pipeline_mode<synchronous>, transform_indices = @transform_4, window_bounds = array<i64: 4, 64>}, {pipeline_mode = #tpu.pipeline_mode<synchronous>, transform_indices = @transform_5, window_bounds = array<i64: 1, 64>}, {pipeline_mode = #tpu.pipeline_mode<synchronous>, transform_indices = @transform_6, window_bounds = array<i64: 1, 64>}, {pipeline_mode = #tpu.pipeline_mode<synchronous>, transform_indices = @transform_7, window_bounds = array<i64: 64, 4>}, {pipeline_mode = #tpu.pipeline_mode<synchronous>, transform_indices = @transform_8, window_bounds = array<i64: 1, 4>}, {transform_indices = @transform_9, window_bounds = array<i64: 16, 4>}]} {
    %c0 = arith.constant 0 : index
    %c0_0 = arith.constant 0 : index
    %0 = vector.load %arg1[%c0, %c0_0] : memref<16x32xf32, #tpu.memory_space<vmem>>, vector<16x32xf32>
    %1 = arith.truncf %0 : vector<16x32xf32> to vector<16x32xbf16>
    %c0_1 = arith.constant 0 : index
    %c0_2 = arith.constant 0 : index
    %2 = vector.load %arg4[%c0_1, %c0_2] : memref<32x64xbf16, #tpu.memory_space<vmem>>, vector<32x64xbf16>
    %cst = arith.constant dense<0.000000e+00> : vector<16x64xf32>
    %3 = tpu.matmul %1, %2, %cst {dimension_numbers = #tpu.dot_dimension_numbers<[1], [0], [0], [1], [0, 0, 1, 1], [], []>} : vector<16x32xbf16>, vector<32x64xbf16>, vector<16x64xf32> -> vector<16x64xf32>
    %c0_3 = arith.constant 0 : index
    %c0_4 = arith.constant 0 : index
    %4 = vector.load %arg2[%c0_3, %c0_4] : memref<16x4xf32, #tpu.memory_space<vmem>>, vector<16x4xf32>
    %5 = arith.truncf %4 : vector<16x4xf32> to vector<16x4xbf16>
    %c0_5 = arith.constant 0 : index
    %c0_6 = arith.constant 0 : index
    %6 = vector.load %arg5[%c0_5, %c0_6] : memref<4x64xbf16, #tpu.memory_space<vmem>>, vector<4x64xbf16>
    %cst_7 = arith.constant dense<0.000000e+00> : vector<16x64xf32>
    %7 = tpu.matmul %5, %6, %cst_7 {dimension_numbers = #tpu.dot_dimension_numbers<[1], [0], [0], [1], [0, 0, 1, 1], [], []>} : vector<16x4xbf16>, vector<4x64xbf16>, vector<16x64xf32> -> vector<16x64xf32>
    %8 = arith.addf %3, %7 : vector<16x64xf32>
    %c0_8 = arith.constant 0 : index
    %c0_9 = arith.constant 0 : index
    %9 = vector.load %arg3[%c0_8, %c0_9] : memref<16x1xf32, #tpu.memory_space<vmem>>, vector<16x1xf32>
    %c0_10 = arith.constant 0 : index
    %c0_11 = arith.constant 0 : index
    %10 = vector.load %arg6[%c0_10, %c0_11] : memref<1x64xf32, #tpu.memory_space<vmem>>, vector<1x64xf32>
    %11 = vector.broadcast %9 : vector<16x1xf32> to vector<16x64xf32>
    %12 = vector.broadcast %10 : vector<1x64xf32> to vector<16x64xf32>
    %13 = arith.mulf %11, %12 : vector<16x64xf32>
    %14 = arith.addf %8, %13 : vector<16x64xf32>
    %c0_12 = arith.constant 0 : index
    %c0_13 = arith.constant 0 : index
    %15 = vector.load %arg7[%c0_12, %c0_13] : memref<1x64xf32, #tpu.memory_space<vmem>>, vector<1x64xf32>
    %16 = vector.broadcast %15 : vector<1x64xf32> to vector<16x64xf32>
    %17 = arith.addf %14, %16 : vector<16x64xf32>
    %18 = arith.negf %17 : vector<16x64xf32>
    %19 = math.exp %18 : vector<16x64xf32>
    %cst_14 = arith.constant 1.000000e+00 : f32
    %20 = vector.broadcast %cst_14 : f32 to vector<16x64xf32>
    %21 = arith.addf %20, %19 : vector<16x64xf32>
    %22 = arith.divf %20, %21 : vector<16x64xf32>
    %23 = arith.mulf %17, %22 : vector<16x64xf32>
    %24 = arith.truncf %23 : vector<16x64xf32> to vector<16x64xbf16>
    %c0_15 = arith.constant 0 : index
    %c0_16 = arith.constant 0 : index
    %25 = vector.load %arg8[%c0_15, %c0_16] : memref<64x4xbf16, #tpu.memory_space<vmem>>, vector<64x4xbf16>
    %cst_17 = arith.constant dense<0.000000e+00> : vector<16x4xf32>
    %26 = tpu.matmul %24, %25, %cst_17 {dimension_numbers = #tpu.dot_dimension_numbers<[1], [0], [0], [1], [0, 0, 1, 1], [], []>} : vector<16x64xbf16>, vector<64x4xbf16>, vector<16x4xf32> -> vector<16x4xf32>
    %c0_18 = arith.constant 0 : index
    %c0_19 = arith.constant 0 : index
    %27 = vector.load %arg9[%c0_18, %c0_19] : memref<1x4xf32, #tpu.memory_space<vmem>>, vector<1x4xf32>
    %28 = vector.broadcast %27 : vector<1x4xf32> to vector<16x4xf32>
    %29 = arith.addf %26, %28 : vector<16x4xf32>
    %c0_20 = arith.constant 0 : index
    %c0_21 = arith.constant 0 : index
    %30 = vector.load %arg10[%c0_20, %c0_21] : memref<16x4xf32, #tpu.memory_space<vmem>>, vector<16x4xf32>
    tpu.vector_store %arg10[%c0_20, %c0_21], %29 {strides = array<i32>} : memref<16x4xf32, #tpu.memory_space<vmem>>, vector<16x4xf32>,
    return
  }
  func.func @transform_0(%arg0: i32) -> (i32, i32) {
    %c0_i32 = arith.constant 0 : i32
    %c0_i32_0 = arith.constant 0 : i32
    return %arg0, %c0_i32 : i32, i32
  }
  func.func @transform_1(%arg0: i32) -> (i32, i32) {
    %c0_i32 = arith.constant 0 : i32
    %c0_i32_0 = arith.constant 0 : i32
    return %arg0, %c0_i32 : i32, i32
  }
  func.func @transform_2(%arg0: i32) -> (i32, i32) {
    %c0_i32 = arith.constant 0 : i32
    %c0_i32_0 = arith.constant 0 : i32
    return %arg0, %c0_i32 : i32, i32
  }
  func.func @transform_3(%arg0: i32) -> (i32, i32) {
    %c0_i32 = arith.constant 0 : i32
    %c0_i32_0 = arith.constant 0 : i32
    %c0_i32_1 = arith.constant 0 : i32
    return %c0_i32, %c0_i32_0 : i32, i32
  }
  func.func @transform_4(%arg0: i32) -> (i32, i32) {
    %c0_i32 = arith.constant 0 : i32
    %c0_i32_0 = arith.constant 0 : i32
    %c0_i32_1 = arith.constant 0 : i32
    return %c0_i32, %c0_i32_0 : i32, i32
  }
  func.func @transform_5(%arg0: i32) -> (i32, i32) {
    %c0_i32 = arith.constant 0 : i32
    %c0_i32_0 = arith.constant 0 : i32
    %c0_i32_1 = arith.constant 0 : i32
    return %c0_i32, %c0_i32_0 : i32, i32
  }
  func.func @transform_6(%arg0: i32) -> (i32, i32) {
    %c0_i32 = arith.constant 0 : i32
    %c0_i32_0 = arith.constant 0 : i32
    %c0_i32_1 = arith.constant 0 : i32
    return %c0_i32, %c0_i32_0 : i32, i32
  }
  func.func @transform_7(%arg0: i32) -> (i32, i32) {
    %c0_i32 = arith.constant 0 : i32
    %c0_i32_0 = arith.constant 0 : i32
    %c0_i32_1 = arith.constant 0 : i32
    return %c0_i32, %c0_i32_0 : i32, i32
  }
  func.func @transform_8(%arg0: i32) -> (i32, i32) {
    %c0_i32 = arith.constant 0 : i32
    %c0_i32_0 = arith.constant 0 : i32
    %c0_i32_1 = arith.constant 0 : i32
    return %c0_i32, %c0_i32_0 : i32, i32
  }
  func.func @transform_9(%arg0: i32) -> (i32, i32) {
    %c0_i32 = arith.constant 0 : i32
    %c0_i32_0 = arith.constant 0 : i32
    return %arg0, %c0_i32 : i32, i32
  }
}

module attributes {stable_mosaic.version = 11 : i64} {
  func.func @flownet_kernel(%arg0: i32, %arg1: memref<16x32xf32, #tpu.memory_space<vmem>>, %arg2: memref<16x4xf32, #tpu.memory_space<vmem>>, %arg3: memref<16x1xf32, #tpu.memory_space<vmem>>, %arg4: memref<32x64xbf16, #tpu.memory_space<vmem>>, %arg5: memref<4x64xbf16, #tpu.memory_space<vmem>>, %arg6: memref<1x64xf32, #tpu.memory_space<vmem>>, %arg7: memref<1x64xf32, #tpu.memory_space<vmem>>, %arg8: memref<64x4xbf16, #tpu.memory_space<vmem>>, %arg9: memref<1x4xf32, #tpu.memory_space<vmem>>, %arg10: memref<16x4xf32, #tpu.memory_space<vmem>>) attributes {dimension_semantics = [#tpu.dimension_semantics<parallel>], iteration_bounds = array<i64: 1>, scalar_prefetch = 0 : i64, scratch_operands = 0 : i64, tpu.core_type = #tpu.core_type<tc>, window_params = [{transform_indices = @transform_0, window_bounds = array<i64: 16, 32>}, {transform_indices = @transform_1, window_bounds = array<i64: 16, 4>}, {transform_indices = @transform_2, window_bounds = array<i64: 16, 1>}, {pipeline_mode = #tpu.pipeline_mode<synchronous>, transform_indices = @transform_3, window_bounds = array<i64: 32, 64>}, {pipeline_mode = #tpu.pipeline_mode<synchronous>, transform_indices = @transform_4, window_bounds = array<i64: 4, 64>}, {pipeline_mode = #tpu.pipeline_mode<synchronous>, transform_indices = @transform_5, window_bounds = array<i64: 1, 64>}, {pipeline_mode = #tpu.pipeline_mode<synchronous>, transform_indices = @transform_6, window_bounds = array<i64: 1, 64>}, {pipeline_mode = #tpu.pipeline_mode<synchronous>, transform_indices = @transform_7, window_bounds = array<i64: 64, 4>}, {pipeline_mode = #tpu.pipeline_mode<synchronous>, transform_indices = @transform_8, window_bounds = array<i64: 1, 4>}, {transform_indices = @transform_9, window_bounds = array<i64: 16, 4>}]} {
    %c0 = arith.constant 0 : index
    %c0_0 = arith.constant 0 : index
    %0 = vector.load %arg1[%c0, %c0_0] : memref<16x32xf32, #tpu.memory_space<vmem>>, vector<16x32xf32>
    %1 = arith.truncf %0 : vector<16x32xf32> to vector<16x32xbf16>
    %c0_1 = arith.constant 0 : index
    %c0_2 = arith.constant 0 : index
    %2 = vector.load %arg4[%c0_1, %c0_2] : memref<32x64xbf16, #tpu.memory_space<vmem>>, vector<32x64xbf16>
    %cst = arith.constant dense<0.000000e+00> : vector<16x64xf32>
    %3 = tpu.matmul %1, %2, %cst {dimension_numbers = #tpu.dot_dimension_numbers<[1], [0], [0], [1], [0, 0, 1, 1], [], []>} : vector<16x32xbf16>, vector<32x64xbf16>, vector<16x64xf32> -> vector<16x64xf32>
    %c0_3 = arith.constant 0 : index
    %c0_4 = arith.constant 0 : index
    %4 = vector.load %arg2[%c0_3, %c0_4] : memref<16x4xf32, #tpu.memory_space<vmem>>, vector<16x4xf32>
    %5 = arith.truncf %4 : vector<16x4xf32> to vector<16x4xbf16>
    %c0_5 = arith.constant 0 : index
    %c0_6 = arith.constant 0 : index
    %6 = vector.load %arg5[%c0_5, %c0_6] : memref<4x64xbf16, #tpu.memory_space<vmem>>, vector<4x64xbf16>
    %cst_7 = arith.constant dense<0.000000e+00> : vector<16x64xf32>
    %7 = tpu.matmul %5, %6, %cst_7 {dimension_numbers = #tpu.dot_dimension_numbers<[1], [0], [0], [1], [0, 0, 1, 1], [], []>} : vector<16x4xbf16>, vector<4x64xbf16>, vector<16x64xf32> -> vector<16x64xf32>
    %8 = arith.addf %3, %7 : vector<16x64xf32>
    %c0_8 = arith.constant 0 : index
    %c0_9 = arith.constant 0 : index
    %9 = vector.load %arg3[%c0_8, %c0_9] : memref<16x1xf32, #tpu.memory_space<vmem>>, vector<16x1xf32>
    %c0_10 = arith.constant 0 : index
    %c0_11 = arith.constant 0 : index
    %10 = vector.load %arg6[%c0_10, %c0_11] : memref<1x64xf32, #tpu.memory_space<vmem>>, vector<1x64xf32>
    %11 = vector.broadcast %9 : vector<16x1xf32> to vector<16x64xf32>
    %12 = vector.broadcast %10 : vector<1x64xf32> to vector<16x64xf32>
    %13 = arith.mulf %11, %12 : vector<16x64xf32>
    %14 = arith.addf %8, %13 : vector<16x64xf32>
    %c0_12 = arith.constant 0 : index
    %c0_13 = arith.constant 0 : index
    %15 = vector.load %arg7[%c0_12, %c0_13] : memref<1x64xf32, #tpu.memory_space<vmem>>, vector<1x64xf32>
    %16 = vector.broadcast %15 : vector<1x64xf32> to vector<16x64xf32>
    %17 = arith.addf %14, %16 : vector<16x64xf32>
    %18 = arith.negf %17 : vector<16x64xf32>
    %19 = math.exp %18 : vector<16x64xf32>
    %cst_14 = arith.constant 1.000000e+00 : f32
    %20 = vector.broadcast %cst_14 : f32 to vector<16x64xf32>
    %21 = arith.addf %20, %19 : vector<16x64xf32>
    %22 = arith.divf %20, %21 : vector<16x64xf32>
    %23 = arith.mulf %17, %22 : vector<16x64xf32>
    %24 = arith.truncf %23 : vector<16x64xf32> to vector<16x64xbf16>
    %c0_15 = arith.constant 0 : index
    %c0_16 = arith.constant 0 : index
    %25 = vector.load %arg8[%c0_15, %c0_16] : memref<64x4xbf16, #tpu.memory_space<vmem>>, vector<64x4xbf16>
    %cst_17 = arith.constant dense<0.000000e+00> : vector<16x4xf32>
    %26 = tpu.matmul %24, %25, %cst_17 {dimension_numbers = #tpu.dot_dimension_numbers<[1], [0], [0], [1], [0, 0, 1, 1], [], []>} : vector<16x64xbf16>, vector<64x4xbf16>, vector<16x4xf32> -> vector<16x4xf32>
    %c0_18 = arith.constant 0 : index
    %c0_19 = arith.constant 0 : index
    %27 = vector.load %arg9[%c0_18, %c0_19] : memref<1x4xf32, #tpu.memory_space<vmem>>, vector<1x4xf32>
    %28 = vector.broadcast %27 : vector<1x4xf32> to vector<16x4xf32>
    %29 = arith.addf %26, %28 : vector<16x4xf32>
    %c0_20 = arith.constant 0 : index
    %c0_21 = arith.constant 0 : index
    %30 = vector.load %arg10[%c0_20, %c0_21] : memref<16x4xf32, #tpu.memory_space<vmem>>, vector<16x4xf32>
    tpu.vector_store %arg10[%c0_20, %c0_21], %29 {strides = array<i32>} : memref<16x4xf32, #tpu.memory_space<vmem>>, vector<16x4xf32>,
    return
  }
  func.func @transform_0(%arg0: i32) -> (i32, i32) {
    %c0_i32 = arith.constant 0 : i32
    %c0_i32_0 = arith.constant 0 : i32
    return %arg0, %c0_i32 : i32, i32
  }
  func.func @transform_1(%arg0: i32) -> (i32, i32) {
    %c0_i32 = arith.constant 0 : i32
    %c0_i32_0 = arith.constant 0 : i32
    return %arg0, %c0_i32 : i32, i32
  }
  func.func @transform_2(%arg0: i32) -> (i32, i32) {
    %c0_i32 = arith.constant 0 : i32
    %c0_i32_0 = arith.constant 0 : i32
    return %arg0, %c0_i32 : i32, i32
  }
  func.func @transform_3(%arg0: i32) -> (i32, i32) {
    %c0_i32 = arith.constant 0 : i32
    %c0_i32_0 = arith.constant 0 : i32
    %c0_i32_1 = arith.constant 0 : i32
    return %c0_i32, %c0_i32_0 : i32, i32
  }
  func.func @transform_4(%arg0: i32) -> (i32, i32) {
    %c0_i32 = arith.constant 0 : i32
    %c0_i32_0 = arith.constant 0 : i32
    %c0_i32_1 = arith.constant 0 : i32
    return %c0_i32, %c0_i32_0 : i32, i32
  }
  func.func @transform_5(%arg0: i32) -> (i32, i32) {
    %c0_i32 = arith.constant 0 : i32
    %c0_i32_0 = arith.constant 0 : i32
    %c0_i32_1 = arith.constant 0 : i32
    return %c0_i32, %c0_i32_0 : i32, i32
  }
  func.func @transform_6(%arg0: i32) -> (i32, i32) {
    %c0_i32 = arith.constant 0 : i32
    %c0_i32_0 = arith.constant 0 : i32
    %c0_i32_1 = arith.constant 0 : i32
    return %c0_i32, %c0_i32_0 : i32, i32
  }
  func.func @transform_7(%arg0: i32) -> (i32, i32) {
    %c0_i32 = arith.constant 0 : i32
    %c0_i32_0 = arith.constant 0 : i32
    %c0_i32_1 = arith.constant 0 : i32
    return %c0_i32, %c0_i32_0 : i32, i32
  }
  func.func @transform_8(%arg0: i32) -> (i32, i32) {
    %c0_i32 = arith.constant 0 : i32
    %c0_i32_0 = arith.constant 0 : i32
    %c0_i32_1 = arith.constant 0 : i32
    return %c0_i32, %c0_i32_0 : i32, i32
  }
  func.func @transform_9(%arg0: i32) -> (i32, i32) {
    %c0_i32 = arith.constant 0 : i32
    %c0_i32_0 = arith.constant 0 : i32
    return %arg0, %c0_i32 : i32, i32
  }
}

</mosaic_0001>

<llo_original>
// kernel: tpu_custom_call.1
$region0: #{tpu_custom_call.1}
  #allocation0 [shape = 'u32[]', space=smem, size = 0x4, offset = 0x4, fixed_abs, tag = 'smem constant byte address 0x4 - core index']
  #allocation1 [shape = 'u32[144,128]{1,0:T(1,128)}', space=vmem, size = 0x12000, scoped, tag = 'internal scratch']
  %s0 = inlined_call_operand.vmem [shape: f32[16,32], index: 0, kind: input, shape index: {}]
  %s1 = inlined_call_operand.vmem [shape: f32[16,4], index: 1, kind: input, shape index: {}]
  %s2 = inlined_call_operand.vmem [shape: f32[16,1], index: 2, kind: input, shape index: {}]
  %s3 = inlined_call_operand.vmem [shape: bf16[32,64], index: 3, kind: input, shape index: {}]
  %s4 = inlined_call_operand.vmem [shape: bf16[4,64], index: 4, kind: input, shape index: {}]
  %s5 = inlined_call_operand.vmem [shape: f32[1,64], index: 5, kind: input, shape index: {}]
  %s6 = inlined_call_operand.vmem [shape: f32[1,64], index: 6, kind: input, shape index: {}]
  %s7 = inlined_call_operand.vmem [shape: bf16[64,4], index: 7, kind: input, shape index: {}]
  %s8 = inlined_call_operand.vmem [shape: f32[1,4], index: 8, kind: input, shape index: {}]
  %s9 = inlined_call_operand.vmem [shape: f32[16,4], index: 9, kind: output, shape index: {}]
  %s10 = sld [smem:[#allocation0]]
  $region46: #{tpu_custom_call.1} parent=0
    _
  %s12 = ssub.s32 1, %s10
  %s13 = scalar_select 0, %s12, %s10
  // Predicated region
  $region2: #{tpu_custom_call.1} parent=0 // pred_check
    _
  $region3: #{tpu_custom_call.1} parent=0 // pred_check_branch
    %15 = sbr.rel (0) target = $region5
  $region4: #{tpu_custom_call.1} parent=0 // pred_region
    _
  $region5: #{tpu_custom_call.1} parent=0 // pred_fallthru
    _
  // Predicated region
  $region6: #{tpu_custom_call.1} parent=0 // pred_check
    _
  $region7: #{tpu_custom_call.1} parent=0 // pred_check_branch
    %17 = sbr.rel (0) target = $region9
  $region8: #{tpu_custom_call.1} parent=0 // pred_region
    _
  $region9: #{tpu_custom_call.1} parent=0 // pred_fallthru
    _
  // Predicated region
  $region10: #{tpu_custom_call.1} parent=0 // pred_check
    _
  $region11: #{tpu_custom_call.1} parent=0 // pred_check_branch
    %19 = sbr.rel (0) target = $region13
  $region12: #{tpu_custom_call.1} parent=0 // pred_region
    _
  $region13: #{tpu_custom_call.1} parent=0 // pred_fallthru
    _
  // Predicated region
  $region14: #{tpu_custom_call.1} parent=0 // pred_check
    _
  $region15: #{tpu_custom_call.1} parent=0 // pred_check_branch
    %21 = sbr.rel (0) target = $region17
  $region16: #{tpu_custom_call.1} parent=0 // pred_region
    _
  $region17: #{tpu_custom_call.1} parent=0 // pred_fallthru
    _
  // Predicated region
  $region18: #{tpu_custom_call.1} parent=0 // pred_check
    _
  $region19: #{tpu_custom_call.1} parent=0 // pred_check_branch
    %23 = sbr.rel (0) target = $region21
  $region20: #{tpu_custom_call.1} parent=0 // pred_region
    _
  $region21: #{tpu_custom_call.1} parent=0 // pred_fallthru
    _
  // Predicated region
  $region22: #{tpu_custom_call.1} parent=0 // pred_check
    _
  $region23: #{tpu_custom_call.1} parent=0 // pred_check_branch
    %25 = sbr.rel (0) target = $region25
  $region24: #{tpu_custom_call.1} parent=0 // pred_region
    _
  $region25: #{tpu_custom_call.1} parent=0 // pred_fallthru
    _
  // Predicated region
  $region26: #{tpu_custom_call.1} parent=0 // pred_check
    _
  $region27: #{tpu_custom_call.1} parent=0 // pred_check_branch
    %27 = sbr.rel (0) target = $region29
  $region28: #{tpu_custom_call.1} parent=0 // pred_region
    _
  $region29: #{tpu_custom_call.1} parent=0 // pred_fallthru
    _
  // Predicated region
  $region30: #{tpu_custom_call.1} parent=0 // pred_check
    _
  $region31: #{tpu_custom_call.1} parent=0 // pred_check_branch
    %29 = sbr.rel (0) target = $region33
  $region32: #{tpu_custom_call.1} parent=0 // pred_region
    _
  $region33: #{tpu_custom_call.1} parent=0 // pred_fallthru
    _
  // Predicated region
  $region34: #{tpu_custom_call.1} parent=0 // pred_check
    _
  $region35: #{tpu_custom_call.1} parent=0 // pred_check_branch
    %31 = sbr.rel (0) target = $region37
  $region36: #{tpu_custom_call.1} parent=0 // pred_region
    _
  $region37: #{tpu_custom_call.1} parent=0 // pred_fallthru
    _
  %v33 = vld [vmem:[%s0] sm:$0xff]
  %v34 = vld [vmem:[%s0 + $0x8] sm:$0xff]
  %v35 = vpack.c.bf16 %v34, %v33
  %v36 = vld [vmem:[%s3] sm:$0xf]
  %v37 = vld [vmem:[%s3 + $0x4] sm:$0xf]
  %v38 = vld [vmem:[%s3 + $0x8] sm:$0xf]
  %v39 = vld [vmem:[%s3 + $0xc] sm:$0xf]
  %v40 = vld [vmem:[%s1] sm:$0xff]
  %v41 = vld [vmem:[%s1 + $0x8] sm:$0xff]
  %v42 = vpack.c.bf16 %v41, %v40
  %v43 = vld [vmem:[%s4] sm:$0x3]
  %vm44 = vcmask 31744
  %v46 = vsel %vm44, %v42, 0
  %vm48 = vcmask 1041408
  %v50 = vsel %vm48, %v43, 0
  %52 = vmatprep.subr.bf16.mxu0 0
  %53 = vmatpush1.bf16.msra.mxu0 0
  %54 = vmatprep.subr.bf16.mxu0 0
  %55 = vmatpush1.bf16.msra.mxu0 0
  %56 = vmatprep.subr.bf16.mxu0 0
  %57 = vmatpush1.bf16.msra.mxu0 0
  %58 = vmatprep.subr.bf16.mxu0 0
  %59 = vmatpush1.bf16.msra.mxu0 0
  %60 = vmatprep.subr.bf16.mxu0 0
  %61 = vmatpush1.bf16.msra.mxu0 0
  %62 = vmatprep.subr.bf16.mxu0 0
  %63 = vmatpush1.bf16.msra.mxu0 0
  %64 = vmatprep.subr.bf16.mxu0 0
  %65 = vmatpush1.bf16.msra.mxu0 0
  %66 = vmatprep.subr.bf16.mxu0 0
  %67 = vmatpush1.bf16.msra.mxu0 %v50
  %68 = vmatprep.subr.bf16.mxu0 0
  %69 = vmatpush2.bf16.msra.mxu0 0
  %70 = vmatprep.subr.bf16.mxu0 0
  %71 = vmatpush2.bf16.msra.mxu0 0
  %72 = vmatprep.subr.bf16.mxu0 0
  %73 = vmatpush2.bf16.msra.mxu0 0
  %74 = vmatprep.subr.bf16.mxu0 0
  %75 = vmatpush2.bf16.msra.mxu0 0
  %76 = vmatprep.subr.bf16.mxu0 0
  %77 = vmatpush2.bf16.msra.mxu0 0
  %78 = vmatprep.subr.bf16.mxu0 0
  %79 = vmatpush2.bf16.msra.mxu0 0
  %80 = vmatprep.subr.bf16.mxu0 0
  %81 = vmatpush2.bf16.msra.mxu0 0
  %82 = vmatprep.subr.bf16.mxu0 0
  %83 = vmatpush2.bf16.msra.mxu0 0
  %84 = vmatprep.mubr.bf16.mxu0 0
  %85 = vmatmul.mubr.bf16.gmra.mxu0 %v46
  %v86 = vpop.f32.mrf.mxu0
  %v87 = vadd.f32 0.0, %v86
  %v88 = vpop.f32.mrf.mxu0
  %v89 = vpop.f32.mrf.mxu0
  %v90 = vadd.f32 0.0, %v89
  %v91 = vpop.f32.mrf.mxu0
  %92 = vdwg.mxu0
  %v97 = vunpack.c.l.b16 %v36
  %v98 = vunpack.c.l.b16 %v37
  %v99 = vunpack.c.l.b16 %v38
  %v100 = vunpack.c.l.b16 %v39
  %v101 = vpack.c.b16 %v98, %v97
  %v102 = vpack.c.b16 %v100, %v99
  %vm105 = vcmask 261120
  %v107 = vsel %vm105, %v35, 0
  %109 = vmatprep.subr.bf16.mxu0 0
  %110 = vmatpush1.bf16.msra.mxu0 0
  %111 = vmatprep.subr.bf16.mxu0 0
  %112 = vmatpush1.bf16.msra.mxu0 0
  %113 = vmatprep.subr.bf16.mxu0 0
  %114 = vmatpush1.bf16.msra.mxu0 0
  %115 = vmatprep.subr.bf16.mxu0 0
  %116 = vmatpush1.bf16.msra.mxu0 0
  %117 = vmatprep.subr.bf16.mxu0 0
  %118 = vmatpush1.bf16.msra.mxu0 0
  %119 = vmatprep.subr.bf16.mxu0 0
  %120 = vmatpush1.bf16.msra.mxu0 0
  %121 = vmatprep.subr.bf16.mxu0 0
  %122 = vmatpush1.bf16.msra.mxu0 %v102
  %123 = vmatprep.subr.bf16.mxu0 0
  %124 = vmatpush1.bf16.msra.mxu0 %v101
  %125 = vmatprep.subr.bf16.mxu0 0
  %126 = vmatpush2.bf16.msra.mxu0 0
  %127 = vmatprep.subr.bf16.mxu0 0
  %128 = vmatpush2.bf16.msra.mxu0 0
  %129 = vmatprep.subr.bf16.mxu0 0
  %130 = vmatpush2.bf16.msra.mxu0 0
  %131 = vmatprep.subr.bf16.mxu0 0
  %132 = vmatpush2.bf16.msra.mxu0 0
  %133 = vmatprep.subr.bf16.mxu0 0
  %134 = vmatpush2.bf16.msra.mxu0 0
  %135 = vmatprep.subr.bf16.mxu0 0
  %136 = vmatpush2.bf16.msra.mxu0 0
  %137 = vmatprep.subr.bf16.mxu0 0
  %138 = vmatpush2.bf16.msra.mxu0 0
  %139 = vmatprep.subr.bf16.mxu0 0
  %140 = vmatpush2.bf16.msra.mxu0 0
  %141 = vmatprep.mubr.bf16.mxu0 0
  %142 = vmatmul.mubr.bf16.gmra.mxu0 %v107
  %v143 = vpop.f32.mrf.mxu0
  %v144 = vadd.f32 %v87, %v143
  %v145 = vpop.f32.mrf.mxu0
  %v146 = vpop.f32.mrf.mxu0
  %v147 = vadd.f32 %v90, %v146
  %v148 = vpop.f32.mrf.mxu0
  %149 = vdwg.mxu0
  %v150 = vld [vmem:[%s2] sm:$0xff]
  %v151 = vld [vmem:[%s2 + $0x8] sm:$0xff]
  %v152 = vld [vmem:[%s5] sm:$0x1]
  %154 = vset.pattern.permute.xlu0 0
  %155 = vperm.xlu0 %154, %v150
  %v156 = vpop.permute.xlu0 %155
  %159 = vset.pattern.permute.xlu0 0
  %160 = vperm.xlu0 %159, %v151
  %v161 = vpop.permute.xlu0 %160
  %v164 = vlaneseq
  %v165 = vshrl.u32 %v164, 7
  %v166 = vsub.s32 0, %v165
  %v167 = vrot.slane %v152, %v166
  %v169 = vmul.f32 %v156, %v167
  %v170 = vmul.f32 %v161, %v167
  %v171 = vadd.f32 %v144, %v169
  %v172 = vadd.f32 %v147, %v170
  %v173 = vld [vmem:[%s6] sm:$0x1]
  %v175 = vlaneseq
  %v176 = vshrl.u32 %v175, 7
  %v177 = vsub.s32 0, %v176
  %v178 = vrot.slane %v173, %v177
  %v180 = vadd.f32 %v171, %v178
  %v181 = vadd.f32 %v172, %v178
  %v182 = vxor.u32 %v180, 2147483648
  %v183 = vxor.u32 %v181, 2147483648
  %v184 = vmul.f32 %v182, 1.442695
  %v185 = vpow.pop %v184
  %v186 = vmul.f32 %v183, 1.442695
  %v187 = vpow.pop %v186
  %v188 = vadd.f32 %v185, 1.0
  %v189 = vadd.f32 %v187, 1.0
  %v190 = vrcp.pop %v188
  %v191 = vmul.f32 1.0, %v190
  %v192 = vrcp.pop %v189
  %v193 = vmul.f32 1.0, %v192
  %v194 = vmul.f32 %v180, %v191
  %v195 = vmul.f32 %v181, %v193
  %v196 = vpack.c.bf16 %v195, %v194
  %v197 = vld [vmem:[%s7] sm:$0xf]
  %v198 = vld [vmem:[%s7 + $0x4] sm:$0xf]
  %v199 = vld [vmem:[%s7 + $0x8] sm:$0xf]
  %v200 = vld [vmem:[%s7 + $0xc] sm:$0xf]
  %v201 = vld [vmem:[%s7 + $0x10] sm:$0xf]
  %v202 = vld [vmem:[%s7 + $0x14] sm:$0xf]
  %v203 = vld [vmem:[%s7 + $0x18] sm:$0xf]
  %v204 = vld [vmem:[%s7 + $0x1c] sm:$0xf]
  %v205 = vld [vmem:[%s8] sm:$0x1]
  %v207 = vlaneseq
  %v208 = vshrl.u32 %v207, 7
  %v209 = vsub.s32 0, %v208
  %v210 = vrot.slane %v205, %v209
  %v220 = vunpack.c.l.b16 %v197
  %v221 = vunpack.c.l.b16 %v198
  %v222 = vunpack.c.l.b16 %v199
  %v223 = vunpack.c.l.b16 %v200
  %v224 = vunpack.c.l.b16 %v201
  %v225 = vunpack.c.l.b16 %v202
  %v226 = vunpack.c.l.b16 %v203
  %v227 = vunpack.c.l.b16 %v204
  %v228 = vpack.c.b16 %v221, %v220
  %v229 = vpack.c.b16 %v223, %v222
  %v230 = vpack.c.b16 %v225, %v224
  %v231 = vpack.c.b16 %v227, %v226
  %vm236 = vcmask 523264
  %v238 = vsel %vm236, %v196, 0
  %240 = vmatprep.subr.bf16.mxu0 0
  %241 = vmatpush1.bf16.msra.mxu0 0
  %242 = vmatprep.subr.bf16.mxu0 0
  %243 = vmatpush1.bf16.msra.mxu0 0
  %244 = vmatprep.subr.bf16.mxu0 0
  %245 = vmatpush1.bf16.msra.mxu0 0
  %246 = vmatprep.subr.bf16.mxu0 0
  %247 = vmatpush1.bf16.msra.mxu0 0
  %248 = vmatprep.subr.bf16.mxu0 0
  %249 = vmatpush1.bf16.msra.mxu0 %v231
  %250 = vmatprep.subr.bf16.mxu0 0
  %251 = vmatpush1.bf16.msra.mxu0 %v230
  %252 = vmatprep.subr.bf16.mxu0 0
  %253 = vmatpush1.bf16.msra.mxu0 %v229
  %254 = vmatprep.subr.bf16.mxu0 0
  %255 = vmatpush1.bf16.msra.mxu0 %v228
  %256 = vmatprep.subr.bf16.mxu0 0
  %257 = vmatpush2.bf16.msra.mxu0 0
  %258 = vmatprep.subr.bf16.mxu0 0
  %259 = vmatpush2.bf16.msra.mxu0 0
  %260 = vmatprep.subr.bf16.mxu0 0
  %261 = vmatpush2.bf16.msra.mxu0 0
  %262 = vmatprep.subr.bf16.mxu0 0
  %263 = vmatpush2.bf16.msra.mxu0 0
  %264 = vmatprep.subr.bf16.mxu0 0
  %265 = vmatpush2.bf16.msra.mxu0 0
  %266 = vmatprep.subr.bf16.mxu0 0
  %267 = vmatpush2.bf16.msra.mxu0 0
  %268 = vmatprep.subr.bf16.mxu0 0
  %269 = vmatpush2.bf16.msra.mxu0 0
  %270 = vmatprep.subr.bf16.mxu0 0
  %271 = vmatpush2.bf16.msra.mxu0 0
  %272 = vmatprep.mubr.bf16.mxu0 0
  %273 = vmatmul.mubr.bf16.gmra.mxu0 %v238
  %v274 = vpop.f32.mrf.mxu0
  %v275 = vadd.f32 %v210, %v274
  %v276 = vpop.f32.mrf.mxu0
  %v277 = vpop.f32.mrf.mxu0
  %v278 = vadd.f32 %v210, %v277
  %v279 = vpop.f32.mrf.mxu0
  %280 = vdwg.mxu0
  %281 = vst.msk [vmem:[%s9] sm:$0xff] %vm44, %v275
  %282 = vst.msk [vmem:[%s9 + $0x8] sm:$0xff] %vm44, %v278
  // Predicated region
  $region38: #{tpu_custom_call.1} parent=0 // pred_check
    _
  $region39: #{tpu_custom_call.1} parent=0 // pred_check_branch
    %284 = sbr.rel (0) target = $region41
  $region40: #{tpu_custom_call.1} parent=0 // pred_region
    _
  $region41: #{tpu_custom_call.1} parent=0 // pred_fallthru
    _
  // Predicated region
  $region42: #{tpu_custom_call.1} parent=0 // pred_check
    _
  $region43: #{tpu_custom_call.1} parent=0 // pred_check_branch
    %286 = sbr.rel (0) target = $region45
  $region44: #{tpu_custom_call.1} parent=0 // pred_region
    _
  $region45: #{tpu_custom_call.1} parent=0 // pred_fallthru
    _

// kernel: tpu_custom_call.1
$region0: #{tpu_custom_call.1}
  #allocation0 [shape = 'u32[]', space=smem, size = 0x4, offset = 0x4, fixed_abs, tag = 'smem constant byte address 0x4 - core index']
  #allocation1 [shape = 'u32[144,128]{1,0:T(1,128)}', space=vmem, size = 0x12000, scoped, tag = 'internal scratch']
  %s0 = inlined_call_operand.vmem [shape: f32[16,32], index: 0, kind: input, shape index: {}]
  %s1 = inlined_call_operand.vmem [shape: f32[16,4], index: 1, kind: input, shape index: {}]
  %s2 = inlined_call_operand.vmem [shape: f32[16,1], index: 2, kind: input, shape index: {}]
  %s3 = inlined_call_operand.vmem [shape: bf16[32,64], index: 3, kind: input, shape index: {}]
  %s4 = inlined_call_operand.vmem [shape: bf16[4,64], index: 4, kind: input, shape index: {}]
  %s5 = inlined_call_operand.vmem [shape: f32[1,64], index: 5, kind: input, shape index: {}]
  %s6 = inlined_call_operand.vmem [shape: f32[1,64], index: 6, kind: input, shape index: {}]
  %s7 = inlined_call_operand.vmem [shape: bf16[64,4], index: 7, kind: input, shape index: {}]
  %s8 = inlined_call_operand.vmem [shape: f32[1,4], index: 8, kind: input, shape index: {}]
  %s9 = inlined_call_operand.vmem [shape: f32[16,4], index: 9, kind: output, shape index: {}]
  %s10 = sld [smem:[#allocation0]]
  $region46: #{tpu_custom_call.1} parent=0
    _
  %s12 = ssub.s32 1, %s10
  %s13 = scalar_select 0, %s12, %s10
  // Predicated region
  $region2: #{tpu_custom_call.1} parent=0 // pred_check
    _
  $region3: #{tpu_custom_call.1} parent=0 // pred_check_branch
    %15 = sbr.rel (0) target = $region5
  $region4: #{tpu_custom_call.1} parent=0 // pred_region
    _
  $region5: #{tpu_custom_call.1} parent=0 // pred_fallthru
    _
  // Predicated region
  $region6: #{tpu_custom_call.1} parent=0 // pred_check
    _
  $region7: #{tpu_custom_call.1} parent=0 // pred_check_branch
    %17 = sbr.rel (0) target = $region9
  $region8: #{tpu_custom_call.1} parent=0 // pred_region
    _
  $region9: #{tpu_custom_call.1} parent=0 // pred_fallthru
    _
  // Predicated region
  $region10: #{tpu_custom_call.1} parent=0 // pred_check
    _
  $region11: #{tpu_custom_call.1} parent=0 // pred_check_branch
    %19 = sbr.rel (0) target = $region13
  $region12: #{tpu_custom_call.1} parent=0 // pred_region
    _
  $region13: #{tpu_custom_call.1} parent=0 // pred_fallthru
    _
  // Predicated region
  $region14: #{tpu_custom_call.1} parent=0 // pred_check
    _
  $region15: #{tpu_custom_call.1} parent=0 // pred_check_branch
    %21 = sbr.rel (0) target = $region17
  $region16: #{tpu_custom_call.1} parent=0 // pred_region
    _
  $region17: #{tpu_custom_call.1} parent=0 // pred_fallthru
    _
  // Predicated region
  $region18: #{tpu_custom_call.1} parent=0 // pred_check
    _
  $region19: #{tpu_custom_call.1} parent=0 // pred_check_branch
    %23 = sbr.rel (0) target = $region21
  $region20: #{tpu_custom_call.1} parent=0 // pred_region
    _
  $region21: #{tpu_custom_call.1} parent=0 // pred_fallthru
    _
  // Predicated region
  $region22: #{tpu_custom_call.1} parent=0 // pred_check
    _
  $region23: #{tpu_custom_call.1} parent=0 // pred_check_branch
    %25 = sbr.rel (0) target = $region25
  $region24: #{tpu_custom_call.1} parent=0 // pred_region
    _
  $region25: #{tpu_custom_call.1} parent=0 // pred_fallthru
    _
  // Predicated region
  $region26: #{tpu_custom_call.1} parent=0 // pred_check
    _
  $region27: #{tpu_custom_call.1} parent=0 // pred_check_branch
    %27 = sbr.rel (0) target = $region29
  $region28: #{tpu_custom_call.1} parent=0 // pred_region
    _
  $region29: #{tpu_custom_call.1} parent=0 // pred_fallthru
    _
  // Predicated region
  $region30: #{tpu_custom_call.1} parent=0 // pred_check
    _
  $region31: #{tpu_custom_call.1} parent=0 // pred_check_branch
    %29 = sbr.rel (0) target = $region33
  $region32: #{tpu_custom_call.1} parent=0 // pred_region
    _
  $region33: #{tpu_custom_call.1} parent=0 // pred_fallthru
    _
  // Predicated region
  $region34: #{tpu_custom_call.1} parent=0 // pred_check
    _
  $region35: #{tpu_custom_call.1} parent=0 // pred_check_branch
    %31 = sbr.rel (0) target = $region37
  $region36: #{tpu_custom_call.1} parent=0 // pred_region
    _
  $region37: #{tpu_custom_call.1} parent=0 // pred_fallthru
    _
  %v33 = vld [vmem:[%s0] sm:$0xff]
  %v34 = vld [vmem:[%s0 + $0x8] sm:$0xff]
  %v35 = vpack.c.bf16 %v34, %v33
  %v36 = vld [vmem:[%s3] sm:$0xf]
  %v37 = vld [vmem:[%s3 + $0x4] sm:$0xf]
  %v38 = vld [vmem:[%s3 + $0x8] sm:$0xf]
  %v39 = vld [vmem:[%s3 + $0xc] sm:$0xf]
  %v40 = vld [vmem:[%s1] sm:$0xff]
  %v41 = vld [vmem:[%s1 + $0x8] sm:$0xff]
  %v42 = vpack.c.bf16 %v41, %v40
  %v43 = vld [vmem:[%s4] sm:$0x3]
  %vm44 = vcmask 31744
  %v46 = vsel %vm44, %v42, 0
  %vm48 = vcmask 1041408
  %v50 = vsel %vm48, %v43, 0
  %52 = vmatprep.subr.bf16.mxu0 0
  %53 = vmatpush1.bf16.msra.mxu0 0
  %54 = vmatprep.subr.bf16.mxu0 0
  %55 = vmatpush1.bf16.msra.mxu0 0
  %56 = vmatprep.subr.bf16.mxu0 0
  %57 = vmatpush1.bf16.msra.mxu0 0
  %58 = vmatprep.subr.bf16.mxu0 0
  %59 = vmatpush1.bf16.msra.mxu0 0
  %60 = vmatprep.subr.bf16.mxu0 0
  %61 = vmatpush1.bf16.msra.mxu0 0
  %62 = vmatprep.subr.bf16.mxu0 0
  %63 = vmatpush1.bf16.msra.mxu0 0
  %64 = vmatprep.subr.bf16.mxu0 0
  %65 = vmatpush1.bf16.msra.mxu0 0
  %66 = vmatprep.subr.bf16.mxu0 0
  %67 = vmatpush1.bf16.msra.mxu0 %v50
  %68 = vmatprep.subr.bf16.mxu0 0
  %69 = vmatpush2.bf16.msra.mxu0 0
  %70 = vmatprep.subr.bf16.mxu0 0
  %71 = vmatpush2.bf16.msra.mxu0 0
  %72 = vmatprep.subr.bf16.mxu0 0
  %73 = vmatpush2.bf16.msra.mxu0 0
  %74 = vmatprep.subr.bf16.mxu0 0
  %75 = vmatpush2.bf16.msra.mxu0 0
  %76 = vmatprep.subr.bf16.mxu0 0
  %77 = vmatpush2.bf16.msra.mxu0 0
  %78 = vmatprep.subr.bf16.mxu0 0
  %79 = vmatpush2.bf16.msra.mxu0 0
  %80 = vmatprep.subr.bf16.mxu0 0
  %81 = vmatpush2.bf16.msra.mxu0 0
  %82 = vmatprep.subr.bf16.mxu0 0
  %83 = vmatpush2.bf16.msra.mxu0 0
  %84 = vmatprep.mubr.bf16.mxu0 0
  %85 = vmatmul.mubr.bf16.gmra.mxu0 %v46
  %v86 = vpop.f32.mrf.mxu0
  %v87 = vadd.f32 0.0, %v86
  %v88 = vpop.f32.mrf.mxu0
  %v89 = vpop.f32.mrf.mxu0
  %v90 = vadd.f32 0.0, %v89
  %v91 = vpop.f32.mrf.mxu0
  %92 = vdwg.mxu0
  %v97 = vunpack.c.l.b16 %v36
  %v98 = vunpack.c.l.b16 %v37
  %v99 = vunpack.c.l.b16 %v38
  %v100 = vunpack.c.l.b16 %v39
  %v101 = vpack.c.b16 %v98, %v97
  %v102 = vpack.c.b16 %v100, %v99
  %vm105 = vcmask 261120
  %v107 = vsel %vm105, %v35, 0
  %109 = vmatprep.subr.bf16.mxu0 0
  %110 = vmatpush1.bf16.msra.mxu0 0
  %111 = vmatprep.subr.bf16.mxu0 0
  %112 = vmatpush1.bf16.msra.mxu0 0
  %113 = vmatprep.subr.bf16.mxu0 0
  %114 = vmatpush1.bf16.msra.mxu0 0
  %115 = vmatprep.subr.bf16.mxu0 0
  %116 = vmatpush1.bf16.msra.mxu0 0
  %117 = vmatprep.subr.bf16.mxu0 0
  %118 = vmatpush1.bf16.msra.mxu0 0
  %119 = vmatprep.subr.bf16.mxu0 0
  %120 = vmatpush1.bf16.msra.mxu0 0
  %121 = vmatprep.subr.bf16.mxu0 0
  %122 = vmatpush1.bf16.msra.mxu0 %v102
  %123 = vmatprep.subr.bf16.mxu0 0
  %124 = vmatpush1.bf16.msra.mxu0 %v101
  %125 = vmatprep.subr.bf16.mxu0 0
  %126 = vmatpush2.bf16.msra.mxu0 0
  %127 = vmatprep.subr.bf16.mxu0 0
  %128 = vmatpush2.bf16.msra.mxu0 0
  %129 = vmatprep.subr.bf16.mxu0 0
  %130 = vmatpush2.bf16.msra.mxu0 0
  %131 = vmatprep.subr.bf16.mxu0 0
  %132 = vmatpush2.bf16.msra.mxu0 0
  %133 = vmatprep.subr.bf16.mxu0 0
  %134 = vmatpush2.bf16.msra.mxu0 0
  %135 = vmatprep.subr.bf16.mxu0 0
  %136 = vmatpush2.bf16.msra.mxu0 0
  %137 = vmatprep.subr.bf16.mxu0 0
  %138 = vmatpush2.bf16.msra.mxu0 0
  %139 = vmatprep.subr.bf16.mxu0 0
  %140 = vmatpush2.bf16.msra.mxu0 0
  %141 = vmatprep.mubr.bf16.mxu0 0
  %142 = vmatmul.mubr.bf16.gmra.mxu0 %v107
  %v143 = vpop.f32.mrf.mxu0
  %v144 = vadd.f32 %v87, %v143
  %v145 = vpop.f32.mrf.mxu0
  %v146 = vpop.f32.mrf.mxu0
  %v147 = vadd.f32 %v90, %v146
  %v148 = vpop.f32.mrf.mxu0
  %149 = vdwg.mxu0
  %v150 = vld [vmem:[%s2] sm:$0xff]
  %v151 = vld [vmem:[%s2 + $0x8] sm:$0xff]
  %v152 = vld [vmem:[%s5] sm:$0x1]
  %154 = vset.pattern.permute.xlu0 0
  %155 = vperm.xlu0 %154, %v150
  %v156 = vpop.permute.xlu0 %155
  %159 = vset.pattern.permute.xlu0 0
  %160 = vperm.xlu0 %159, %v151
  %v161 = vpop.permute.xlu0 %160
  %v164 = vlaneseq
  %v165 = vshrl.u32 %v164, 7
  %v166 = vsub.s32 0, %v165
  %v167 = vrot.slane %v152, %v166
  %v169 = vmul.f32 %v156, %v167
  %v170 = vmul.f32 %v161, %v167
  %v171 = vadd.f32 %v144, %v169
  %v172 = vadd.f32 %v147, %v170
  %v173 = vld [vmem:[%s6] sm:$0x1]
  %v175 = vlaneseq
  %v176 = vshrl.u32 %v175, 7
  %v177 = vsub.s32 0, %v176
  %v178 = vrot.slane %v173, %v177
  %v180 = vadd.f32 %v171, %v178
  %v181 = vadd.f32 %v172, %v178
  %v182 = vxor.u32 %v180, 2147483648
  %v183 = vxor.u32 %v181, 2147483648
  %v184 = vmul.f32 %v182, 1.442695
  %v185 = vpow.pop %v184
  %v186 = vmul.f32 %v183, 1.442695
  %v187 = vpow.pop %v186
  %v188 = vadd.f32 %v185, 1.0
  %v189 = vadd.f32 %v187, 1.0
  %v190 = vrcp.pop %v188
  %v191 = vmul.f32 1.0, %v190
  %v192 = vrcp.pop %v189
  %v193 = vmul.f32 1.0, %v192
  %v194 = vmul.f32 %v180, %v191
  %v195 = vmul.f32 %v181, %v193
  %v196 = vpack.c.bf16 %v195, %v194
  %v197 = vld [vmem:[%s7] sm:$0xf]
  %v198 = vld [vmem:[%s7 + $0x4] sm:$0xf]
  %v199 = vld [vmem:[%s7 + $0x8] sm:$0xf]
  %v200 = vld [vmem:[%s7 + $0xc] sm:$0xf]
  %v201 = vld [vmem:[%s7 + $0x10] sm:$0xf]
  %v202 = vld [vmem:[%s7 + $0x14] sm:$0xf]
  %v203 = vld [vmem:[%s7 + $0x18] sm:$0xf]
  %v204 = vld [vmem:[%s7 + $0x1c] sm:$0xf]
  %v205 = vld [vmem:[%s8] sm:$0x1]
  %v207 = vlaneseq
  %v208 = vshrl.u32 %v207, 7
  %v209 = vsub.s32 0, %v208
  %v210 = vrot.slane %v205, %v209
  %v220 = vunpack.c.l.b16 %v197
  %v221 = vunpack.c.l.b16 %v198
  %v222 = vunpack.c.l.b16 %v199
  %v223 = vunpack.c.l.b16 %v200
  %v224 = vunpack.c.l.b16 %v201
  %v225 = vunpack.c.l.b16 %v202
  %v226 = vunpack.c.l.b16 %v203
  %v227 = vunpack.c.l.b16 %v204
  %v228 = vpack.c.b16 %v221, %v220
  %v229 = vpack.c.b16 %v223, %v222
  %v230 = vpack.c.b16 %v225, %v224
  %v231 = vpack.c.b16 %v227, %v226
  %vm236 = vcmask 523264
  %v238 = vsel %vm236, %v196, 0
  %240 = vmatprep.subr.bf16.mxu0 0
  %241 = vmatpush1.bf16.msra.mxu0 0
  %242 = vmatprep.subr.bf16.mxu0 0
  %243 = vmatpush1.bf16.msra.mxu0 0
  %244 = vmatprep.subr.bf16.mxu0 0
  %245 = vmatpush1.bf16.msra.mxu0 0
  %246 = vmatprep.subr.bf16.mxu0 0
  %247 = vmatpush1.bf16.msra.mxu0 0
  %248 = vmatprep.subr.bf16.mxu0 0
  %249 = vmatpush1.bf16.msra.mxu0 %v231
  %250 = vmatprep.subr.bf16.mxu0 0
  %251 = vmatpush1.bf16.msra.mxu0 %v230
  %252 = vmatprep.subr.bf16.mxu0 0
  %253 = vmatpush1.bf16.msra.mxu0 %v229
  %254 = vmatprep.subr.bf16.mxu0 0
  %255 = vmatpush1.bf16.msra.mxu0 %v228
  %256 = vmatprep.subr.bf16.mxu0 0
  %257 = vmatpush2.bf16.msra.mxu0 0
  %258 = vmatprep.subr.bf16.mxu0 0
  %259 = vmatpush2.bf16.msra.mxu0 0
  %260 = vmatprep.subr.bf16.mxu0 0
  %261 = vmatpush2.bf16.msra.mxu0 0
  %262 = vmatprep.subr.bf16.mxu0 0
  %263 = vmatpush2.bf16.msra.mxu0 0
  %264 = vmatprep.subr.bf16.mxu0 0
  %265 = vmatpush2.bf16.msra.mxu0 0
  %266 = vmatprep.subr.bf16.mxu0 0
  %267 = vmatpush2.bf16.msra.mxu0 0
  %268 = vmatprep.subr.bf16.mxu0 0
  %269 = vmatpush2.bf16.msra.mxu0 0
  %270 = vmatprep.subr.bf16.mxu0 0
  %271 = vmatpush2.bf16.msra.mxu0 0
  %272 = vmatprep.mubr.bf16.mxu0 0
  %273 = vmatmul.mubr.bf16.gmra.mxu0 %v238
  %v274 = vpop.f32.mrf.mxu0
  %v275 = vadd.f32 %v210, %v274
  %v276 = vpop.f32.mrf.mxu0
  %v277 = vpop.f32.mrf.mxu0
  %v278 = vadd.f32 %v210, %v277
  %v279 = vpop.f32.mrf.mxu0
  %280 = vdwg.mxu0
  %281 = vst.msk [vmem:[%s9] sm:$0xff] %vm44, %v275
  %282 = vst.msk [vmem:[%s9 + $0x8] sm:$0xff] %vm44, %v278
  // Predicated region
  $region38: #{tpu_custom_call.1} parent=0 // pred_check
    _
  $region39: #{tpu_custom_call.1} parent=0 // pred_check_branch
    %284 = sbr.rel (0) target = $region41
  $region40: #{tpu_custom_call.1} parent=0 // pred_region
    _
  $region41: #{tpu_custom_call.1} parent=0 // pred_fallthru
    _
  // Predicated region
  $region42: #{tpu_custom_call.1} parent=0 // pred_check
    _
  $region43: #{tpu_custom_call.1} parent=0 // pred_check_branch
    %286 = sbr.rel (0) target = $region45
  $region44: #{tpu_custom_call.1} parent=0 // pred_region
    _
  $region45: #{tpu_custom_call.1} parent=0 // pred_fallthru
    _

</llo_original>
